<compile_context>
chip_gen: v5e
topology: v5e:2x2
jax: 0.10.0
libtpu: 0.0.40
codegen_flags: <defaults>
</compile_context>

<pallas_src>
import jax
import jax.numpy as jnp
from jax.experimental import pallas as pl
from jax.experimental.pallas import tpu as pltpu


def _conv1x1_nchw_kernel(x_ref, w_ref, b_ref, o_ref):
    # x_ref: (C, TN) slab of one batch's (C, H*W) image
    # w_ref: (NC, C) resident weight, b_ref: (NC, 1) resident bias
    # o_ref: (NC, TN) -- TN stays in lanes on purpose: flipping the output so
    #        NC (often 1-4) lands in lanes would force masked partial stores,
    #        the single biggest measured writeback penalty.  MXU occupancy is
    #        irrelevant -- this kernel is HBM-bandwidth-bound.
    acc = jnp.dot(w_ref[...], x_ref[...], preferred_element_type=jnp.float32)
    o_ref[...] = (acc + b_ref[...]).astype(o_ref.dtype)


def _vmem_caps():
    """Generation-aware (tile-picker budget, scoped-vmem cap) in bytes."""
    phys = None
    try:
        phys = getattr(pltpu.get_tpu_info(), "vmem_capacity_bytes", None)
    except Exception:
        phys = None
    if not phys:
        phys = 64 * 1024 * 1024                # unknown -> assume smallest (v7x)
    if phys <= 64 * 1024 * 1024:               # v7x: 64 MiB physical, keep headroom
        return 24 * 1024 * 1024, 40 * 1024 * 1024
    return 48 * 1024 * 1024, 96 * 1024 * 1024  # v5e / v6e: 128 MiB physical


def _pick_hw_tile(hw, c, nc, itemsize, budget_bytes, *, min_tiles=1):
    """Pick the lane (HW) tile.

    Prefers the largest tile whose double-buffered footprint fits the budget so
    each grid step moves a large DMA (per-step overhead ~0.35us; small tiles sit
    far below the HBM roofline).  A tile is either the full HW extent or a
    multiple of 128 (ragged last block handled by masked writeback).
    `min_tiles` splits the work so v7x's two TensorCores both get grid points.
    """
    fixed = 2 * (nc * c + nc) * itemsize              # resident weight + bias

    def fits(tn):
        return fixed + 2 * (c + nc) * tn * itemsize <= budget_bytes

    if hw <= 128:
        return hw                                      # full-dim block (legal)

    cands = []
    if hw <= 16384:
        cands.append(hw)                               # one tile per batch image
    cands += [t for t in (8192, 4096, 2048, 1024, 512, 256, 128) if t < hw]

    tn = 128
    for t in cands:
        if fits(t):
            tn = t
            break

    # Make sure both v7x TensorCores get work when the batch axis is trivial.
    while min_tiles > 1 and pl.cdiv(hw, tn) < min_tiles and tn > 128:
        tn = max(128, (((tn // 2) + 127) // 128) * 128)
    return tn


def conv1x1_nchw_pallas(x, weight, bias, *, hw_tile=None):
    """x: (B, C, H, W), weight: (NC, C), bias: (NC,) -> (B, NC, H, W)."""
    B, C, H, W = x.shape
    NC = weight.shape[0]
    HW = H * W
    itemsize = jnp.dtype(x.dtype).itemsize

    x3 = x.reshape(B, C, HW)          # free reshape (contiguous, no transpose)
    b2 = bias.reshape(NC, 1)          # broadcasts over lanes inside the kernel

    budget, vmem_cap = _vmem_caps()
    if hw_tile is None:
        tn = _pick_hw_tile(HW, C, NC, itemsize, budget,
                           min_tiles=2 if B == 1 else 1)
    else:
        tn = hw_tile                  # test/override hook (must be 128-mult or HW)
    n_tiles = pl.cdiv(HW, tn)         # ragged last block: masked writeback, no pad

    # Size the scoped VMEM limit from the actual double-buffered footprint.
    footprint = 2 * (C + NC) * tn * itemsize + 2 * (NC * C + NC) * itemsize
    vmem_limit = int(min(vmem_cap,
                         max(16 * 1024 * 1024, footprint + 8 * 1024 * 1024)))

    cost = pl.CostEstimate(
        flops=2 * B * HW * C * NC,
        transcendentals=0,
        bytes_accessed=(B * C * HW + NC * C + NC + B * NC * HW) * itemsize,
    )

    out3 = pl.pallas_call(
        _conv1x1_nchw_kernel,
        out_shape=jax.ShapeDtypeStruct((B, NC, HW), x.dtype),
        grid_spec=pltpu.PrefetchScalarGridSpec(
            num_scalar_prefetch=0,
            grid=(B, n_tiles),
            in_specs=[
                pl.BlockSpec((None, C, tn), lambda b, j: (b, 0, j)),  # x slab
                # weight/bias blocks are grid-invariant (resident); they are tiny
                # next to the x/out tiles, so the spare pipeline buffer is cheap
                # and we skip pipeline_mode overrides for portability.
                pl.BlockSpec((NC, C), lambda b, j: (0, 0)),           # weight
                pl.BlockSpec((NC, 1), lambda b, j: (0, 0)),           # bias
            ],
            out_specs=pl.BlockSpec((None, NC, tn), lambda b, j: (b, 0, j)),
        ),
        compiler_params=pltpu.CompilerParams(
            dimension_semantics=("parallel", "parallel"),  # both axes independent
            vmem_limit_bytes=vmem_limit,
        ),
        cost_estimate=cost,
    )(x3, weight, b2)

    return out3.reshape(B, NC, H, W)


class LinearClassifierTokenPallas:
    """JAX/Pallas equivalent of the PyTorch LinearClassifierToken (1x1 Conv2d)."""

    def __init__(self, embedding_dim, nc=1, tokenW=32, tokenH=32, key=None):
        self.W = tokenW
        self.H = tokenH
        self.nc = nc
        self.embedding_dim = embedding_dim
        if key is None:
            key = jax.random.PRNGKey(0)
        kw, kb = jax.random.split(key)
        # Deterministic init mimicking PyTorch Conv2d default (uniform +/- 1/sqrt(fan_in))
        fan_in = embedding_dim  # 1x1 kernel
        bound = 1.0 / (fan_in ** 0.5)
        # PyTorch conv weight shape: (nc, embedding_dim, 1, 1) -> stored as (nc, embedding_dim)
        self.weight = jax.random.uniform(
            kw, (nc, embedding_dim), jnp.float32, minval=-bound, maxval=bound
        )
        self.bias = jax.random.uniform(
            kb, (nc,), jnp.float32, minval=-bound, maxval=bound
        )

    def __call__(self, x):
        # x: NCHW (B, C, H, W) -> NCHW (B, nc, H, W); no transposes anywhere.
        B, C, H, Wd = x.shape
        assert C == self.embedding_dim
        # The kernel is dtype-agnostic: feeding bf16 activations/weights straight
        # from the producer halves HBM read traffic (the kernel is HBM-bound);
        # the matmul still accumulates in f32.  No standalone cast pass is added
        # here, per perf guidance -- weights stay f32 to match PyTorch numerics.
        return conv1x1_nchw_pallas(x, self.weight, self.bias)


if __name__ == "__main__":
    key = jax.random.PRNGKey(0)
    k_x, k_params, k_x2 = jax.random.split(key, 3)

    # Main check: shapes consistent with the module (embedding_dim=32, 16x16 tokens)
    B, C, H, W = 2, 32, 16, 16   # x: (2, 32, 16, 16)
    NC = 4

    x = jax.random.normal(k_x, (B, C, H, W), jnp.float32)
    model = LinearClassifierTokenPallas(embedding_dim=C, nc=NC, tokenW=W, tokenH=H,
                                        key=k_params)
    out = jax.block_until_ready(model(x))

    ref = jnp.einsum("bchw,oc->bohw", x, model.weight) + model.bias[None, :, None, None]
    assert out.shape == (B, NC, H, W)
    assert jnp.allclose(out, ref, atol=1e-5, rtol=1e-5)

    # Ragged-edge check: HW not a multiple of the tile -> Pallas masked writeback
    Hr, Wr = 17, 16                                   # HW = 272 = 2*128 + 16
    x_r = jax.random.normal(k_x2, (1, C, Hr, Wr), jnp.float32)
    out_r = jax.block_until_ready(
        conv1x1_nchw_pallas(x_r, model.weight, model.bias, hw_tile=128))
    ref_r = (jnp.einsum("bchw,oc->bohw", x_r, model.weight)
             + model.bias[None, :, None, None])
    assert out_r.shape == (1, NC, Hr, Wr)
    assert jnp.allclose(out_r, ref_r, atol=1e-5, rtol=1e-5)

    print("KERNEL_OK")
</pallas_src>

<mosaic_0001>
module attributes {stable_mosaic.version = 11 : i64} {
  func.func @_conv1x1_nchw_kernel(%arg0: i32, %arg1: i32, %arg2: memref<1x32x256xf32, #tpu.memory_space<vmem>>, %arg3: memref<4x32xf32, #tpu.memory_space<vmem>>, %arg4: memref<4x1xf32, #tpu.memory_space<vmem>>, %arg5: memref<1x4x256xf32, #tpu.memory_space<vmem>>) attributes {dimension_semantics = [#tpu.dimension_semantics<parallel>, #tpu.dimension_semantics<parallel>], iteration_bounds = array<i64: 2, 1>, scalar_prefetch = 0 : i64, scratch_operands = 0 : i64, tpu.core_type = #tpu.core_type<tc>, window_params = [{transform_indices = @transform_0, window_bounds = array<i64: 1, 32, 256>}, {pipeline_mode = #tpu.pipeline_mode<synchronous>, transform_indices = @transform_1, window_bounds = array<i64: 4, 32>}, {pipeline_mode = #tpu.pipeline_mode<synchronous>, transform_indices = @transform_2, window_bounds = array<i64: 4, 1>}, {transform_indices = @transform_3, window_bounds = array<i64: 1, 4, 256>}]} {
    %c0 = arith.constant 0 : index
    %c0_0 = arith.constant 0 : index
    %0 = vector.load %arg3[%c0, %c0_0] : memref<4x32xf32, #tpu.memory_space<vmem>>, vector<4x32xf32>
    %c0_1 = arith.constant 0 : index
    %c0_2 = arith.constant 0 : index
    %c0_3 = arith.constant 0 : index
    %1 = vector.load %arg2[%c0_1, %c0_2, %c0_3] : memref<1x32x256xf32, #tpu.memory_space<vmem>>, vector<1x32x256xf32>
    %2 = vector.shape_cast %1 : vector<1x32x256xf32> to vector<32x256xf32>
    %cst = arith.constant dense<0.000000e+00> : vector<4x256xf32>
    %3 = tpu.matmul %0, %2, %cst {dimension_numbers = #tpu.dot_dimension_numbers<[1], [0], [0], [1], [0, 0, 1, 1], [], []>} : vector<4x32xf32>, vector<32x256xf32>, vector<4x256xf32> -> vector<4x256xf32>
    %c0_4 = arith.constant 0 : index
    %c0_5 = arith.constant 0 : index
    %4 = vector.load %arg4[%c0_4, %c0_5] : memref<4x1xf32, #tpu.memory_space<vmem>>, vector<4x1xf32>
    %5 = vector.broadcast %4 : vector<4x1xf32> to vector<4x256xf32>
    %6 = arith.addf %3, %5 : vector<4x256xf32>
    %c0_6 = arith.constant 0 : index
    %c0_7 = arith.constant 0 : index
    %c0_8 = arith.constant 0 : index
    %7 = vector.load %arg5[%c0_6, %c0_7, %c0_8] : memref<1x4x256xf32, #tpu.memory_space<vmem>>, vector<1x4x256xf32>
    %8 = vector.shape_cast %7 : vector<1x4x256xf32> to vector<4x256xf32>
    %9 = vector.shape_cast %6 : vector<4x256xf32> to vector<1x4x256xf32>
    tpu.vector_store %arg5[%c0_6, %c0_7, %c0_8], %9 {strides = array<i32>} : memref<1x4x256xf32, #tpu.memory_space<vmem>>, vector<1x4x256xf32>,
    return
  }
  func.func @transform_0(%arg0: i32, %arg1: i32) -> (i32, i32, i32) {
    %c0_i32 = arith.constant 0 : i32
    %c0_i32_0 = arith.constant 0 : i32
    return %arg0, %c0_i32, %arg1 : i32, i32, i32
  }
  func.func @transform_1(%arg0: i32, %arg1: i32) -> (i32, i32) {
    %c0_i32 = arith.constant 0 : i32
    %c0_i32_0 = arith.constant 0 : i32
    %c0_i32_1 = arith.constant 0 : i32
    return %c0_i32, %c0_i32_0 : i32, i32
  }
  func.func @transform_2(%arg0: i32, %arg1: i32) -> (i32, i32) {
    %c0_i32 = arith.constant 0 : i32
    %c0_i32_0 = arith.constant 0 : i32
    %c0_i32_1 = arith.constant 0 : i32
    return %c0_i32, %c0_i32_0 : i32, i32
  }
  func.func @transform_3(%arg0: i32, %arg1: i32) -> (i32, i32, i32) {
    %c0_i32 = arith.constant 0 : i32
    %c0_i32_0 = arith.constant 0 : i32
    return %arg0, %c0_i32, %arg1 : i32, i32, i32
  }
}

</mosaic_0001>

<llo_original>
// kernel: tpu_custom_call.1
$region0: #{tpu_custom_call.1}
  #allocation0 [shape = 'u32[]', space=smem, size = 0x4, offset = 0x4, fixed_abs, tag = 'smem constant byte address 0x4 - core index']
  #allocation1 [shape = 'u32[72,128]{1,0:T(1,128)}', space=vmem, size = 0x9000, scoped, tag = 'internal scratch']
  %s0 = inlined_call_operand.hbm [shape: f32[2,32,256], index: 0, kind: input, shape index: {}]
  %s1 = inlined_call_operand.vmem [shape: f32[4,32], index: 1, kind: input, shape index: {}]
  %s2 = inlined_call_operand.vmem [shape: f32[4,1], index: 2, kind: input, shape index: {}]
  %s3 = inlined_call_operand.hbm [shape: f32[2,4,256], index: 3, kind: output, shape index: {}]
  %s4 = sld [smem:[#allocation0]]
  $region49: #{tpu_custom_call.1} parent=0
    _
  %s6 = ssub.s32 1, %s4
  %s7 = scalar_select 0, %s6, %s4
  $region1: #{tpu_custom_call.1} parent=0
    #allocation2 [shape = 'u8[65536]{0}', space=vmem, size = 0x10000, scoped, tag = 'input window, operand 0']
    #allocation3 [shape = 's32[2]{0}', space=sflag, size = 0x8, scoped, tag = 'scoped memory for tpu_custom_call.1']
    #allocation4 [shape = 's32[2]{0}', space=sflag, size = 0x8, scoped, tag = 'scoped memory for tpu_custom_call.1']
    #allocation5 [shape = 'u8[8192]{0}', space=vmem, size = 0x2000, scoped, tag = 'output window, operand 0']
    %8 = vsyncpa [#allocation3], 0
    %s9 = scalar_lea.sflag [#allocation3], 1
    %10 = vsyncpa %s9, 0
    %11 = vsyncpa [#allocation4], 0
    %s12 = scalar_lea.sflag [#allocation4], 1
    %13 = vsyncpa %s12, 0
    loop: start=0, step=1, limit=4
    $region2: #{tpu_custom_call.1} parent=1 // loop_pre_header
      _
    $region3: #{tpu_custom_call.1} parent=1 // loop_header
      %s15 = sphi 0, %s19
      %p16 = scmp.ge.s32.totalorder %s15, 4
      %s22 = sphi 0, %s34
      %s23 = sphi 0, %s30
      %s24 = sphi 0, %s22
      %s25 = sphi 0, %s23
      %s26 = sphi 0, %s24
      %s27 = sphi 0, %s25
      %s39 = sphi 0, %s41
      %s42 = sphi 0, %s39
      %s43 = sphi 0, %s42
      %s59 = sphi 0, %s43
      %s63 = sphi 0, %s63
      %s65 = sphi 0, %s63
      %s66 = sphi 0, %s65
      %s80 = sphi 0, %s66
      %s84 = sphi 0, %s84
      %s86 = sphi 0, %s84
      %s87 = sphi 0, %s86
      %s101 = sphi 0, %s87
      %s109 = sphi 0, %s111
      %s112 = sphi 0, %s109
      %s113 = sphi 0, %s112
      %s129 = sphi 0, %s113
    $region4: #{tpu_custom_call.1} parent=1 // loop_header_branch
      %18 = sbr.rel (%p16) target = $region8
    $region5: #{tpu_custom_call.1} parent=1 // loop_body
      %s20 = ssub.s32 %s15, 1
      %s21 = ssub.s32 %s15, 2
      %s28 = sadd.s32 1, %s23
      %p29 = scmp.ge.s32.totalorder %s28, 1
      %s30 = scalar_select %p29, 0, %s28
      %s31 = sadd.s32 1, %s22
      %s32 = scalar_select %p29, %s31, %s22
      %p33 = scmp.ge.s32.totalorder %s32, 2
      %s34 = scalar_select %p33, 0, %s32
      %s35 = ssub.s32 %s22, %s34
      %s36 = ssub.s32 %s23, %s30
      %s37 = sor.u32 %s35, %s36
      %p38 = scmp.eq.s32.totalorder %s37, 0
      %s40 = sadd.s32 %s39, 1
      %s41 = scalar_select %p38, %s39, %s40
      %p44 = pneg %p38
      %p45 = scmp.eq.s32.totalorder %s15, 1
      %p46 = por %p44, %p45
      %p47 = scmp.ne.s32.totalorder %s39, %s42
      %p48 = scmp.eq.s32.totalorder %s15, 0
      %p49 = por %p47, %p48
      %p50 = scmp.ne.s32.totalorder %s39, %s42
      %p51 = scmp.eq.s32.totalorder %s20, 1
      %p52 = por %p50, %p51
      %p53 = scmp.ne.s32.totalorder %s42, %s43
      %p54 = scmp.eq.s32.totalorder %s20, 0
      %p55 = por %p53, %p54
      %p56 = scmp.ne.s32.totalorder %s42, %s43
      %p57 = scmp.eq.s32.totalorder %s21, 1
      %p58 = por %p56, %p57
      %p60 = scmp.ne.s32.totalorder %s43, %s59
      %p61 = scmp.eq.s32.totalorder %s21, 0
      %p62 = por %p60, %p61
      %s64 = sadd.s32 %s63, 1
      %p67 = scmp.eq.s32.totalorder %s15, 1
      %p68 = scmp.ne.s32.totalorder %s63, %s65
      %p69 = scmp.eq.s32.totalorder %s15, 0
      %p70 = por %p68, %p69
      %p71 = scmp.ne.s32.totalorder %s63, %s65
      %p72 = scmp.eq.s32.totalorder %s20, 1
      %p73 = por %p71, %p72
      %p74 = scmp.ne.s32.totalorder %s65, %s66
      %p75 = scmp.eq.s32.totalorder %s20, 0
      %p76 = por %p74, %p75
      %p77 = scmp.ne.s32.totalorder %s65, %s66
      %p78 = scmp.eq.s32.totalorder %s21, 1
      %p79 = por %p77, %p78
      %p81 = scmp.ne.s32.totalorder %s66, %s80
      %p82 = scmp.eq.s32.totalorder %s21, 0
      %p83 = por %p81, %p82
      %s85 = sadd.s32 %s84, 1
      %p88 = scmp.eq.s32.totalorder %s15, 1
      %p89 = scmp.ne.s32.totalorder %s84, %s86
      %p90 = scmp.eq.s32.totalorder %s15, 0
      %p91 = por %p89, %p90
      %p92 = scmp.ne.s32.totalorder %s84, %s86
      %p93 = scmp.eq.s32.totalorder %s20, 1
      %p94 = por %p92, %p93
      %p95 = scmp.ne.s32.totalorder %s86, %s87
      %p96 = scmp.eq.s32.totalorder %s20, 0
      %p97 = por %p95, %p96
      %p98 = scmp.ne.s32.totalorder %s86, %s87
      %p99 = scmp.eq.s32.totalorder %s21, 1
      %p100 = por %p98, %p99
      %p102 = scmp.ne.s32.totalorder %s87, %s101
      %p103 = scmp.eq.s32.totalorder %s21, 0
      %p104 = por %p102, %p103
      %s105 = ssub.s32 %s22, %s34
      %s106 = ssub.s32 %s23, %s30
      %s107 = sor.u32 %s105, %s106
      %p108 = scmp.eq.s32.totalorder %s107, 0
      %s110 = sadd.s32 %s109, 1
      %s111 = scalar_select %p108, %s109, %s110
      %p114 = pneg %p108
      %p115 = scmp.eq.s32.totalorder %s15, 1
      %p116 = por %p114, %p115
      %p117 = scmp.ne.s32.totalorder %s109, %s112
      %p118 = scmp.eq.s32.totalorder %s15, 0
      %p119 = por %p117, %p118
      %p120 = scmp.ne.s32.totalorder %s109, %s112
      %p121 = scmp.eq.s32.totalorder %s20, 1
      %p122 = por %p120, %p121
      %p123 = scmp.ne.s32.totalorder %s112, %s113
      %p124 = scmp.eq.s32.totalorder %s20, 0
      %p125 = por %p123, %p124
      %p126 = scmp.ne.s32.totalorder %s112, %s113
      %p127 = scmp.eq.s32.totalorder %s21, 1
      %p128 = por %p126, %p127
      %p130 = scmp.ne.s32.totalorder %s113, %s129
      %p131 = scmp.eq.s32.totalorder %s21, 0
      %p132 = por %p130, %p131
      %p133 = scmp.le.s32.totalorder 1, %s15
      %p134 = scmp.lt.s32.totalorder %s15, 3
      %p135 = pnand %p133, %p134
      %p136 = pneg %p135
      // Predicated region
      $region9: #{tpu_custom_call.1} parent=5 // pred_check
        _
      $region10: #{tpu_custom_call.1} parent=5 // pred_check_branch
        %138 = sbr.rel (%p135) target = $region12
      $region11: #{tpu_custom_call.1} parent=5 // pred_region
        %s139 = ssub.s32 %s15, 1
        // Predicated region
        $region13: #{tpu_custom_call.1} parent=11 // pred_check
          %p140 = pneg %p76
        $region14: #{tpu_custom_call.1} parent=11 // pred_check_branch
          %142 = sbr.rel (%p140) target = $region16
        $region15: #{tpu_custom_call.1} parent=11 // pred_region
          _
        $region16: #{tpu_custom_call.1} parent=11 // pred_fallthru
          _
        // Predicated region
        $region17: #{tpu_custom_call.1} parent=11 // pred_check
          %p143 = pneg %p97
        $region18: #{tpu_custom_call.1} parent=11 // pred_check_branch
          %145 = sbr.rel (%p143) target = $region20
        $region19: #{tpu_custom_call.1} parent=11 // pred_region
          _
        $region20: #{tpu_custom_call.1} parent=11 // pred_fallthru
          _
      $region12: #{tpu_custom_call.1} parent=5 // pred_fallthru
        _
      %p146 = scmp.lt.s32.totalorder %s15, 2
      // Predicated region
      $region21: #{tpu_custom_call.1} parent=5 // pred_check
        %p147 = pneg %p146
      $region22: #{tpu_custom_call.1} parent=5 // pred_check_branch
        %149 = sbr.rel (%p147) target = $region24
      $region23: #{tpu_custom_call.1} parent=5 // pred_region
        // Predicated region
        $region25: #{tpu_custom_call.1} parent=23 // pred_check
          %p150 = pneg %p49
        $region26: #{tpu_custom_call.1} parent=23 // pred_check_branch
          %152 = sbr.rel (%p150) target = $region28
        $region27: #{tpu_custom_call.1} parent=23 // pred_region
          %s153 = sand.u32 %s39, 1
          %s154 = scalar_lea.sflag [#allocation3], %s153
          %s155 = sand.u32 %s39, 1
          %s156 = smul.addr %s155, 64
          %s157 = scalar_lea.vmem [#allocation2], %s156
          %s158 = smul.u32 2, %s23
          %160 = vsyncadd %s154, 0
          %s161 = smul.addr %s22, 8
          %s162 = sadd.s32 %s158, %s161
          %s163 = smul.addr %s162, 8
          %s164 = scalar_lea.hbm %s0, %s163
          %s165 = sshll.u32 %s164, 4
          %s166 = int_to_ptr.hbm [resolvable:$true] %s165
          %s167 = sshll.u32 %s157, 4
          %s168 = int_to_ptr.vmem [resolvable:$true] %s167
          %173 = dma.hbm_to_vmem [thread:$0]  %s166, 1024, %s168, %s154, 256, 256, 16
        $region28: #{tpu_custom_call.1} parent=23 // pred_fallthru
          _
      $region24: #{tpu_custom_call.1} parent=5 // pred_fallthru
        _
      %p174 = scmp.le.s32.totalorder 1, %s15
      %p175 = scmp.lt.s32.totalorder %s15, 3
      %p176 = pnand %p174, %p175
      %p177 = pneg %p176
      // Predicated region
      $region29: #{tpu_custom_call.1} parent=5 // pred_check
        _
      $region30: #{tpu_custom_call.1} parent=5 // pred_check_branch
        %179 = sbr.rel (%p176) target = $region32
      $region31: #{tpu_custom_call.1} parent=5 // pred_region
        %s180 = ssub.s32 %s15, 1
        %s181 = sand.u32 %s42, 1
        %s182 = scalar_lea.sflag [#allocation3], %s181
        %s183 = sand.u32 %s42, 1
        %s184 = smul.addr %s183, 64
        %s185 = scalar_lea.vmem [#allocation2], %s184
        // Predicated region
        $region33: #{tpu_custom_call.1} parent=31 // pred_check
          %p186 = pneg %p55
        $region34: #{tpu_custom_call.1} parent=31 // pred_check_branch
          %188 = sbr.rel (%p186) target = $region36
        $region35: #{tpu_custom_call.1} parent=31 // pred_region
          %190 = dma.done %s182, 1024
        $region36: #{tpu_custom_call.1} parent=31 // pred_fallthru
          _
        %s191 = sand.u32 %s42, 1
        %s192 = scalar_lea.sflag [#allocation3], %s191
        %s193 = sand.u32 %s42, 1
        %s194 = smul.addr %s193, 64
        %s195 = scalar_lea.vmem [#allocation2], %s194
        %p196 = pneg %p55
        %p197 = pneg %p52
        %p198 = pneg %p76
        %p199 = pneg %p73
        %p200 = pneg %p97
        %p201 = pneg %p94
        %p202 = pneg %p125
        %p203 = pneg %p122
        %s204 = sand.u32 %s112, 1
        %s205 = scalar_lea.sflag [#allocation4], %s204
        %s206 = sand.u32 %s112, 1
        %s207 = smul.addr %s206, 8
        %s208 = scalar_lea.vmem [#allocation5], %s207
        %s209 = smul.u32 2, %s25
        %s210 = smul.u32 2, %s25
        %v211 = vld [vmem:[%s1] sm:$0xf]
        %v212 = vld [vmem:[%s185] sm:$0xff]
        %v213 = vld [vmem:[%s185 + $0x8] sm:$0xff]
        %v214 = vld [vmem:[%s185 + $0x10] sm:$0xff]
        %v215 = vld [vmem:[%s185 + $0x18] sm:$0xff]
        %v216 = vld [vmem:[%s185 + $0x20] sm:$0xff]
        %v217 = vld [vmem:[%s185 + $0x28] sm:$0xff]
        %v218 = vld [vmem:[%s185 + $0x30] sm:$0xff]
        %v219 = vld [vmem:[%s185 + $0x38] sm:$0xff]
        %v220 = vld [vmem:[%s2] sm:$0xf]
        %222 = vset.pattern.permute.xlu0 0
        %223 = vperm.xlu0 %222, %v220
        %v224 = vpop.permute.xlu0 %223
        %vm226 = vcmask 261120
        %v228 = vsel %vm226, %v211, 0
        %230 = vmatpush.msra.mxu0 0.0
        %231 = vmatpush.msra.mxu0 0.0
        %232 = vmatpush.msra.mxu0 0.0
        %233 = vmatpush.msra.mxu0 0.0
        %234 = vmatpush.msra.mxu0 0.0
        %235 = vmatpush.msra.mxu0 0.0
        %236 = vmatpush.msra.mxu0 0.0
        %237 = vmatpush.msra.mxu0 0.0
        %238 = vmatpush.msra.mxu0 0.0
        %239 = vmatpush.msra.mxu0 0.0
        %240 = vmatpush.msra.mxu0 0.0
        %241 = vmatpush.msra.mxu0 0.0
        %242 = vmatpush.msra.mxu0 %v218
        %243 = vmatpush.msra.mxu0 %v216
        %244 = vmatpush.msra.mxu0 %v214
        %245 = vmatpush.msra.mxu0 %v212
        %246 = vmatmul.f32.gmra.mxu0 %v228
        %v247 = vpop.f32.mrf.mxu0
        %v248 = vadd.f32 %v224, %v247
        %249 = vdwg.mxu0
        %250 = vmatpush.msra.mxu0 0.0
        %251 = vmatpush.msra.mxu0 0.0
        %252 = vmatpush.msra.mxu0 0.0
        %253 = vmatpush.msra.mxu0 0.0
        %254 = vmatpush.msra.mxu0 0.0
        %255 = vmatpush.msra.mxu0 0.0
        %256 = vmatpush.msra.mxu0 0.0
        %257 = vmatpush.msra.mxu0 0.0
        %258 = vmatpush.msra.mxu0 0.0
        %259 = vmatpush.msra.mxu0 0.0
        %260 = vmatpush.msra.mxu0 0.0
        %261 = vmatpush.msra.mxu0 0.0
        %262 = vmatpush.msra.mxu0 %v219
        %263 = vmatpush.msra.mxu0 %v217
        %264 = vmatpush.msra.mxu0 %v215
        %265 = vmatpush.msra.mxu0 %v213
        %266 = vmatmul.f32.gmra.mxu0 %v228
        %v267 = vpop.f32.mrf.mxu0
        %v268 = vadd.f32 %v224, %v267
        %269 = vdwg.mxu0
        %v272 = vrot.slane %v268, 4
        %vm273 = vcmask 1043456
        %v274 = vsel %vm273, %v248, %v272
        %276 = vst [vmem:[%s208] sm:$0xff] %v274
        %s277 = sand.u32 %s112, 1
        %s278 = scalar_lea.sflag [#allocation4], %s277
        %s279 = sand.u32 %s112, 1
        %s280 = smul.addr %s279, 8
        %s281 = scalar_lea.vmem [#allocation5], %s280
        // Predicated region
        $region37: #{tpu_custom_call.1} parent=31 // pred_check
          %p282 = pneg %p122
        $region38: #{tpu_custom_call.1} parent=31 // pred_check_branch
          %284 = sbr.rel (%p282) target = $region40
        $region39: #{tpu_custom_call.1} parent=31 // pred_region
          %s285 = smul.u32 2, %s25
          %287 = vsyncadd %s278, 0
          %s288 = smul.addr %s24, 2
          %s289 = sadd.s32 %s285, %s288
          %s290 = smul.addr %s289, 4
          %s291 = scalar_lea.hbm %s3, %s290
          %s293 = sshll.u32 %s281, 4
          %s294 = int_to_ptr.vmem [resolvable:$true] %s293
          %s295 = sshll.u32 %s291, 4
          %s296 = int_to_ptr.hbm [resolvable:$true] %s295
          %298 = dma.vmem_to_hbm [thread:$0]  %s294, 128, %s296, %s278
        $region40: #{tpu_custom_call.1} parent=31 // pred_fallthru
          _
      $region32: #{tpu_custom_call.1} parent=5 // pred_fallthru
        _
      %p299 = scmp.le.s32.totalorder 2, %s15
      // Predicated region
      $region41: #{tpu_custom_call.1} parent=5 // pred_check
        %p300 = pneg %p299
      $region42: #{tpu_custom_call.1} parent=5 // pred_check_branch
        %302 = sbr.rel (%p300) target = $region44
      $region43: #{tpu_custom_call.1} parent=5 // pred_region
        %s303 = ssub.s32 %s15, 2
        // Predicated region
        $region45: #{tpu_custom_call.1} parent=43 // pred_check
          %p304 = pneg %p128
        $region46: #{tpu_custom_call.1} parent=43 // pred_check_branch
          %306 = sbr.rel (%p304) target = $region48
        $region47: #{tpu_custom_call.1} parent=43 // pred_region
          %s307 = sand.u32 %s113, 1
          %s308 = scalar_lea.sflag [#allocation4], %s307
          %s309 = sand.u32 %s113, 1
          %s310 = smul.addr %s309, 8
          %s311 = scalar_lea.vmem [#allocation5], %s310
          %313 = dma.done %s308, 128
        $region48: #{tpu_custom_call.1} parent=43 // pred_fallthru
          _
      $region44: #{tpu_custom_call.1} parent=5 // pred_fallthru
        _
    $region6: #{tpu_custom_call.1} parent=1 // loop_footer
      %s19 = sadd.s32 1, %s15
    $region7: #{tpu_custom_call.1} parent=1 // loop_footer_branch
      %14 = sbr.rel target = $region3
    $region8: #{tpu_custom_call.1} parent=1 // loop_exit
      _
    %314 = vsyncpa [#allocation3], 1
    %s315 = scalar_lea.sflag [#allocation3], 1
    %316 = vsyncpa %s315, 1
    %317 = vsyncpa [#allocation4], 1
    %s318 = scalar_lea.sflag [#allocation4], 1
    %319 = vsyncpa %s318, 1

</llo_original>
